<compile_context>
chip_gen: v6e
topology: v6e:2x2x1
jax: 0.10.0
libtpu: 0.0.40
codegen_flags: <defaults>
</compile_context>

<pallas_src>
import functools

import jax
import jax.numpy as jnp
from jax import lax
from jax.experimental import pallas as pl
from jax.experimental.pallas import tpu as pltpu

BN_EPS = 1e-5


def _round_up(x, m):
    return -(-x // m) * m


def _pad_to(x, shape):
    pads = tuple((0, t - s) for s, t in zip(x.shape, shape))
    if any(p[1] for p in pads):
        x = jnp.pad(x, pads)
    return x


def _vmem_budget_bytes():
    """Per-chip VMEM budget: 3/4 of capacity, capped at 100 MiB.
    v5e/v6e (128 MiB) -> 96 MiB windows; v7x (64 MiB) -> 48 MiB (safe)."""
    try:
        cap = int(pltpu.get_tpu_info().vmem_capacity_bytes)
    except Exception:
        cap = 64 * 1024 * 1024  # conservative fallback, safe on every generation
    return min(cap * 3 // 4, 100 * 1024 * 1024)


# --------------------------------------------------------------------------- #
# Phase A: accumulate attention = (theta_x @ phi_x^T) / Cl over N tiles.
#   (the 1/Cl scale is pre-folded into the theta weights/bias)
# --------------------------------------------------------------------------- #
def energy_kernel(xh_ref, xl_ref, wth_ref, bth_ref, wphi_ref, bphi_ref,
                  attn_ref, *, last_s, last_t, valid_in_last, masked):
    t = pl.program_id(2)

    @pl.when(t == 0)
    def _():
        attn_ref[...] = jnp.zeros_like(attn_ref)

    # 1x1 convs == channel matmuls (bf16 MXU, f32 accumulation).
    theta = jnp.dot(wth_ref[...], xh_ref[...],
                    preferred_element_type=jnp.float32) + bth_ref[...]   # (Clp, tn)
    phi = jnp.dot(wphi_ref[...], xl_ref[...],
                  preferred_element_type=jnp.float32) + bphi_ref[...]    # (Clp, tn)

    def accumulate(phi_val):
        # Contract the lane (N) axis of both operands: theta @ phi^T without a
        # transpose (no XLU relayout).
        attn_ref[...] += lax.dot_general(
            theta.astype(jnp.bfloat16), phi_val.astype(jnp.bfloat16),
            dimension_numbers=(((1,), (1,)), ((), ())),
            preferred_element_type=jnp.float32)

    if masked:
        # Padding is confined (by construction) to the globally-last N tile, so
        # only that step pays the iota+where mask (zeroes the bias contribution
        # on zero-padded lanes).
        s = pl.program_id(1)
        is_last = jnp.logical_and(s == last_s, t == last_t)

        @pl.when(jnp.logical_not(is_last))
        def _():
            accumulate(phi)

        @pl.when(is_last)
        def _():
            lane = lax.broadcasted_iota(jnp.int32, phi.shape, 1)
            accumulate(jnp.where(lane < valid_in_last, phi, 0.0))
    else:
        accumulate(phi)


# --------------------------------------------------------------------------- #
# Phase B: single streamed GEMM  z = M @ x_l + m_bias + x_h   (bf16 output).
#   M / m_bias fold the g conv, attention, W conv and BN (precomputed per batch).
# --------------------------------------------------------------------------- #
def apply_kernel(m_ref, bias_ref, xl_ref, xh_ref, out_ref):
    z = jnp.dot(m_ref[...], xl_ref[...],
                preferred_element_type=jnp.float32)                       # (Chp, tn)
    z = z + bias_ref[...] + xh_ref[...].astype(jnp.float32)
    out_ref[...] = z.astype(out_ref.dtype)


# --------------------------------------------------------------------------- #
# Wrapper
# --------------------------------------------------------------------------- #
def cnl_forward(x_h, x_l, folded, *, tile_n=None):
    """x_h: (B, Ch, H, W), x_l: (B, Cl, H, W)  (same spatial size, flag=0).

    `folded` comes from fold_params(): bf16 theta/phi weights (1/Cl folded into
    theta), f32 g / BN-folded W parameters for the host-side composition.
    Returns bf16 (B, Ch, H, W).
    """
    B, Ch, H, W = x_h.shape
    _, Cl, Hl, Wl = x_l.shape
    N = H * W
    assert Hl * Wl == N, "flag=0 requires matching spatial sizes"

    # Channel (sublane) padding for clean bf16 (16,128) tile packing.
    Chp = _round_up(Ch, 16)
    Clp = _round_up(Cl, 16)

    vmem_budget = _vmem_budget_bytes()
    n_pad0 = _round_up(N, 128)

    # ---- Lane-dense tile selection: biggest tile that fits the VMEM budget ----
    if tile_n is None:
        # bf16 bytes per lane-column (double-buffered streams + bf16 output),
        # conservative superset of both phases; spend at most half the budget.
        per_col = 2 * 2 * (Chp + Clp) + 2 * 2 * Chp
        tn_cap = max(128, ((vmem_budget // 2) // per_col) // 128 * 128)
        tn = min(n_pad0, 8192, tn_cap)
    else:
        tn = max(128, (min(tile_n, n_pad0) // 128) * 128)
    n_pad = _round_up(N, tn)            # padding confined to the last tile
    num_t = n_pad // tn
    masked = n_pad != N

    # Split the N reduction so Phase A has a shardable parallel axis when B is
    # small (keeps v7x's second TensorCore busy).  Partial sums added in JAX.
    n_split = 2 if (num_t % 2 == 0 and B < 4) else 1
    T = num_t // n_split

    # ---- Inputs: reshape, cast to bf16 once, pad channels + lanes with zeros ----
    xh_p = _pad_to(x_h.reshape(B, Ch, N).astype(jnp.bfloat16), (B, Chp, n_pad))
    xl_p = _pad_to(x_l.reshape(B, Cl, N).astype(jnp.bfloat16), (B, Clp, n_pad))

    # Phase-A weights, padded (tiny, one-time).
    wth = _pad_to(folded["theta_w"], (Clp, Chp))
    bth = _pad_to(folded["theta_b"], (Clp, 1))
    wph = _pad_to(folded["phi_w"], (Clp, Clp))
    bph = _pad_to(folded["phi_b"], (Clp, 1))

    full_a = lambda shape: pl.BlockSpec(shape, lambda b, s, t: (0,) * len(shape))

    # ---- Phase A: attention accumulated over the N-tile axis ("arbitrary"). ----
    attn_parts = pl.pallas_call(
        functools.partial(energy_kernel,
                          last_s=n_split - 1, last_t=T - 1,
                          valid_in_last=N - (num_t - 1) * tn, masked=masked),
        out_shape=jax.ShapeDtypeStruct((B * n_split, Clp, Clp), jnp.float32),
        grid_spec=pltpu.PrefetchScalarGridSpec(
            num_scalar_prefetch=0,
            grid=(B, n_split, T),
            in_specs=[
                pl.BlockSpec((pl.Squeezed(), Chp, tn),
                             lambda b, s, t: (b, 0, s * T + t)),            # x_h
                pl.BlockSpec((pl.Squeezed(), Clp, tn),
                             lambda b, s, t: (b, 0, s * T + t)),            # x_l
                full_a((Clp, Chp)), full_a((Clp, 1)),                       # theta (pre-scaled)
                full_a((Clp, Clp)), full_a((Clp, 1)),                       # phi
            ],
            out_specs=pl.BlockSpec((pl.Squeezed(), Clp, Clp),
                                   lambda b, s, t: (b * n_split + s, 0, 0)),
        ),
        compiler_params=pltpu.CompilerParams(
            dimension_semantics=("parallel", "parallel", "arbitrary"),
            vmem_limit_bytes=vmem_budget),
    )(xh_p, xl_p, wth, bth, wph, bph)

    # ---- Host-side composition (tiny): fold g-conv, attention, W-conv & BN. ----
    attn = attn_parts.reshape(B, n_split, Clp, Clp).sum(axis=1)[:, :Cl, :Cl]
    M = jnp.einsum("oc,bcd,de->boe", folded["W_w"], attn, folded["g_w"])     # (B,Ch,Cl)
    m_bias = (jnp.einsum("oc,bcd,dk->bok", folded["W_w"], attn, folded["g_b"])
              + folded["W_b"][None])                                         # (B,Ch,1)
    M_p = _pad_to(M, (B, Chp, Clp)).astype(jnp.bfloat16)
    mb_p = _pad_to(m_bias, (B, Chp, 1)).astype(jnp.float32)

    # ---- Phase B: one streamed GEMM + bias + residual, bf16 output. ----
    out_pad = pl.pallas_call(
        apply_kernel,
        out_shape=jax.ShapeDtypeStruct((B, Chp, n_pad), jnp.bfloat16),
        grid_spec=pltpu.PrefetchScalarGridSpec(
            num_scalar_prefetch=0,
            grid=(B, num_t),
            in_specs=[
                pl.BlockSpec((pl.Squeezed(), Chp, Clp), lambda b, t: (b, 0, 0)),  # M
                pl.BlockSpec((pl.Squeezed(), Chp, 1), lambda b, t: (b, 0, 0)),    # bias
                pl.BlockSpec((pl.Squeezed(), Clp, tn), lambda b, t: (b, 0, t)),   # x_l
                pl.BlockSpec((pl.Squeezed(), Chp, tn), lambda b, t: (b, 0, t)),   # x_h
            ],
            out_specs=pl.BlockSpec((pl.Squeezed(), Chp, tn), lambda b, t: (b, 0, t)),
        ),
        compiler_params=pltpu.CompilerParams(
            dimension_semantics=("parallel", "parallel"),
            vmem_limit_bytes=vmem_budget),
    )(M_p, mb_p, xl_p, xh_p)

    return out_pad[:, :Ch, :N].reshape(B, Ch, H, W)


# --------------------------------------------------------------------------- #
# Parameter handling
# --------------------------------------------------------------------------- #
def init_params(key, high_dim, low_dim):
    """Synthetic parameters matching CNL.__init__ shapes (1x1 convs as (Cout,Cin),
    biases as (C,1)).

    NOTE: the PyTorch module initializes BN gamma=beta=0, which makes W_y == 0 and
    z == x_h -- useless for validating the attention path.  We therefore use
    non-trivial (post-training-like) BN parameters for the correctness check;
    the kernel itself is generic over any BN parameters.
    """
    ks = jax.random.split(key, 12)

    def conv(kw, kb, cout, cin):
        bound = 1.0 / (cin ** 0.5)
        w = jax.random.uniform(kw, (cout, cin), jnp.float32, -bound, bound)
        b = jax.random.uniform(kb, (cout, 1), jnp.float32, -bound, bound)
        return w, b

    g_w, g_b = conv(ks[0], ks[1], low_dim, low_dim)
    th_w, th_b = conv(ks[2], ks[3], low_dim, high_dim)
    ph_w, ph_b = conv(ks[4], ks[5], low_dim, low_dim)
    W_w, W_b = conv(ks[6], ks[7], high_dim, low_dim)
    return {
        "g_w": g_w, "g_b": g_b,
        "theta_w": th_w, "theta_b": th_b,
        "phi_w": ph_w, "phi_b": ph_b,
        "W_w": W_w, "W_b": W_b,
        "bn_gamma": jax.random.uniform(ks[8], (high_dim, 1), jnp.float32, 0.5, 1.5),
        "bn_beta": jax.random.uniform(ks[9], (high_dim, 1), jnp.float32, -0.2, 0.2),
        "bn_mean": jax.random.uniform(ks[10], (high_dim, 1), jnp.float32, -0.5, 0.5),
        "bn_var": jax.random.uniform(ks[11], (high_dim, 1), jnp.float32, 0.5, 1.5),
    }


def fold_params(params, eps=BN_EPS):
    """One-time constant folding (host side):
       * eval-mode BN folded into the W conv:  W' = s*W_w, b' = s*(W_b - mean) + beta
         with s = gamma / sqrt(var + eps)
       * attention scale 1/Cl folded into the theta weights/bias
       * theta/phi weights cast to bf16 (Phase A MXU operands); g / fused-W kept
         f32 for the host-side M composition."""
    Cl = params["theta_w"].shape[0]
    s = params["bn_gamma"] / jnp.sqrt(params["bn_var"] + eps)          # (Ch, 1)
    scale = 1.0 / Cl
    return {
        "theta_w": (params["theta_w"] * scale).astype(jnp.bfloat16),
        "theta_b": (params["theta_b"] * scale).astype(jnp.float32),
        "phi_w": params["phi_w"].astype(jnp.bfloat16),
        "phi_b": params["phi_b"].astype(jnp.float32),
        "g_w": params["g_w"].astype(jnp.float32),
        "g_b": params["g_b"].astype(jnp.float32),
        "W_w": (params["W_w"] * s).astype(jnp.float32),
        "W_b": (s * (params["W_b"] - params["bn_mean"])
                + params["bn_beta"]).astype(jnp.float32),
    }


def cnl_reference(x_h, x_l, params):
    """Pure-JAX f32 reference of the PyTorch module (flag=0, eval-mode BN)."""
    B, Ch, H, W = x_h.shape
    Cl = x_l.shape[1]
    N = H * W
    xh = x_h.reshape(B, Ch, N)
    xl = x_l.reshape(B, Cl, N)
    g_x = jnp.einsum("oc,bcn->bon", params["g_w"], xl) + params["g_b"][None]
    th = jnp.einsum("oc,bcn->bon", params["theta_w"], xh) + params["theta_b"][None]
    ph = jnp.einsum("oc,bcn->bon", params["phi_w"], xl) + params["phi_b"][None]
    energy = jnp.einsum("bcn,bdn->bcd", th, ph)
    attn = energy / energy.shape[-1]
    y = jnp.einsum("bcd,bdn->bcn", attn, g_x)
    wy = jnp.einsum("oc,bcn->bon", params["W_w"], y) + params["W_b"][None]
    inv = jax.lax.rsqrt(params["bn_var"][None] + BN_EPS)
    bn = (wy - params["bn_mean"][None]) * inv * params["bn_gamma"][None] + params["bn_beta"][None]
    return (bn + xh).reshape(B, Ch, H, W)


if __name__ == "__main__":
    B, high_dim, low_dim = 2, 16, 8

    key = jax.random.PRNGKey(0)
    k_p, k_d = jax.random.split(key)
    params = init_params(k_p, high_dim, low_dim)
    folded = fold_params(params)

    # Config 1: auto tile (whole padded N in one lane-dense tile).
    # Config 2: forced 128-tile with N=225 (not a multiple of 128) -> exercises
    #           the masked last tile, the multi-tile accumulation and the
    #           split-reduction path.
    configs = [(16, 16, None), (15, 15, 128)]

    for idx, (H, W, tile_n) in enumerate(configs):
        k_h, k_l = jax.random.split(jax.random.fold_in(k_d, idx))
        x_h = jax.random.normal(k_h, (B, high_dim, H, W), jnp.float32)
        x_l = jax.random.normal(k_l, (B, low_dim, H, W), jnp.float32)

        z = cnl_forward(x_h, x_l, folded, tile_n=tile_n)
        jax.block_until_ready(z)

        z_ref = cnl_reference(x_h, x_l, params)
        assert z.shape == (B, high_dim, H, W)
        z32 = z.astype(jnp.float32)
        max_err = float(jnp.max(jnp.abs(z32 - z_ref)))
        # bf16 matmul operands + bf16 output vs f32 reference -> loose tolerance.
        assert jnp.allclose(z32, z_ref, atol=2e-1, rtol=1e-1), (
            f"config {idx}: mismatch vs reference, max abs err {max_err}")

    print("KERNEL_OK")
</pallas_src>

<mosaic_0001>
module attributes {stable_mosaic.version = 11 : i64} {
  func.func @energy_kernel(%arg0: i32, %arg1: i32, %arg2: i32, %arg3: memref<1x16x256xbf16, #tpu.memory_space<vmem>>, %arg4: memref<1x16x256xbf16, #tpu.memory_space<vmem>>, %arg5: memref<16x16xbf16, #tpu.memory_space<vmem>>, %arg6: memref<16x1xf32, #tpu.memory_space<vmem>>, %arg7: memref<16x16xbf16, #tpu.memory_space<vmem>>, %arg8: memref<16x1xf32, #tpu.memory_space<vmem>>, %arg9: memref<1x16x16xf32, #tpu.memory_space<vmem>>) attributes {dimension_semantics = [#tpu.dimension_semantics<parallel>, #tpu.dimension_semantics<parallel>, #tpu.dimension_semantics<arbitrary>], iteration_bounds = array<i64: 2, 1, 1>, scalar_prefetch = 0 : i64, scratch_operands = 0 : i64, tpu.core_type = #tpu.core_type<tc>, window_params = [{transform_indices = @transform_0, window_bounds = array<i64: 1, 16, 256>}, {transform_indices = @transform_1, window_bounds = array<i64: 1, 16, 256>}, {pipeline_mode = #tpu.pipeline_mode<synchronous>, transform_indices = @transform_2, window_bounds = array<i64: 16, 16>}, {pipeline_mode = #tpu.pipeline_mode<synchronous>, transform_indices = @transform_3, window_bounds = array<i64: 16, 1>}, {pipeline_mode = #tpu.pipeline_mode<synchronous>, transform_indices = @transform_4, window_bounds = array<i64: 16, 16>}, {pipeline_mode = #tpu.pipeline_mode<synchronous>, transform_indices = @transform_5, window_bounds = array<i64: 16, 1>}, {transform_indices = @transform_6, window_bounds = array<i64: 1, 16, 16>}]} {
    %c0_i32 = arith.constant 0 : i32
    %0 = arith.cmpi eq, %arg2, %c0_i32 : i32
    %1 = arith.extui %0 : i1 to i32
    %c0_i32_0 = arith.constant 0 : i32
    %2 = arith.cmpi ne, %1, %c0_i32_0 : i32
    scf.if %2 {
      %cst_22 = arith.constant 0.000000e+00 : f32
      %26 = vector.broadcast %cst_22 : f32 to vector<16x16xf32>
      %c0_23 = arith.constant 0 : index
      %c0_24 = arith.constant 0 : index
      %c0_25 = arith.constant 0 : index
      %27 = vector.load %arg9[%c0_23, %c0_24, %c0_25] : memref<1x16x16xf32, #tpu.memory_space<vmem>>, vector<1x16x16xf32>
      %28 = vector.shape_cast %27 : vector<1x16x16xf32> to vector<16x16xf32>
      %29 = vector.shape_cast %26 : vector<16x16xf32> to vector<1x16x16xf32>
      tpu.vector_store %arg9[%c0_23, %c0_24, %c0_25], %29 {strides = array<i32>} : memref<1x16x16xf32, #tpu.memory_space<vmem>>, vector<1x16x16xf32>,
    } else {
    }
    %c0 = arith.constant 0 : index
    %c0_1 = arith.constant 0 : index
    %3 = vector.load %arg5[%c0, %c0_1] : memref<16x16xbf16, #tpu.memory_space<vmem>>, vector<16x16xbf16>
    %c0_2 = arith.constant 0 : index
    %c0_3 = arith.constant 0 : index
    %c0_4 = arith.constant 0 : index
    %4 = vector.load %arg3[%c0_2, %c0_3, %c0_4] : memref<1x16x256xbf16, #tpu.memory_space<vmem>>, vector<1x16x256xbf16>
    %5 = vector.shape_cast %4 : vector<1x16x256xbf16> to vector<16x256xbf16>
    %cst = arith.constant dense<0.000000e+00> : vector<16x256xf32>
    %6 = tpu.matmul %3, %5, %cst {dimension_numbers = #tpu.dot_dimension_numbers<[1], [0], [0], [1], [0, 0, 1, 1], [], []>} : vector<16x16xbf16>, vector<16x256xbf16>, vector<16x256xf32> -> vector<16x256xf32>
    %c0_5 = arith.constant 0 : index
    %c0_6 = arith.constant 0 : index
    %7 = vector.load %arg6[%c0_5, %c0_6] : memref<16x1xf32, #tpu.memory_space<vmem>>, vector<16x1xf32>
    %8 = vector.broadcast %7 : vector<16x1xf32> to vector<16x256xf32>
    %9 = arith.addf %6, %8 : vector<16x256xf32>
    %c0_7 = arith.constant 0 : index
    %c0_8 = arith.constant 0 : index
    %10 = vector.load %arg7[%c0_7, %c0_8] : memref<16x16xbf16, #tpu.memory_space<vmem>>, vector<16x16xbf16>
    %c0_9 = arith.constant 0 : index
    %c0_10 = arith.constant 0 : index
    %c0_11 = arith.constant 0 : index
    %11 = vector.load %arg4[%c0_9, %c0_10, %c0_11] : memref<1x16x256xbf16, #tpu.memory_space<vmem>>, vector<1x16x256xbf16>
    %12 = vector.shape_cast %11 : vector<1x16x256xbf16> to vector<16x256xbf16>
    %cst_12 = arith.constant dense<0.000000e+00> : vector<16x256xf32>
    %13 = tpu.matmul %10, %12, %cst_12 {dimension_numbers = #tpu.dot_dimension_numbers<[1], [0], [0], [1], [0, 0, 1, 1], [], []>} : vector<16x16xbf16>, vector<16x256xbf16>, vector<16x256xf32> -> vector<16x256xf32>
    %c0_13 = arith.constant 0 : index
    %c0_14 = arith.constant 0 : index
    %14 = vector.load %arg8[%c0_13, %c0_14] : memref<16x1xf32, #tpu.memory_space<vmem>>, vector<16x1xf32>
    %15 = vector.broadcast %14 : vector<16x1xf32> to vector<16x256xf32>
    %16 = arith.addf %13, %15 : vector<16x256xf32>
    %c0_15 = arith.constant 0 : index
    %c0_16 = arith.constant 0 : index
    %c0_17 = arith.constant 0 : index
    %17 = vector.load %arg9[%c0_15, %c0_16, %c0_17] : memref<1x16x16xf32, #tpu.memory_space<vmem>>, vector<1x16x16xf32>
    %18 = vector.shape_cast %17 : vector<1x16x16xf32> to vector<16x16xf32>
    %19 = arith.truncf %9 : vector<16x256xf32> to vector<16x256xbf16>
    %20 = arith.truncf %16 : vector<16x256xf32> to vector<16x256xbf16>
    %cst_18 = arith.constant dense<0.000000e+00> : vector<16x16xf32>
    %21 = tpu.matmul %19, %20, %cst_18 {dimension_numbers = #tpu.dot_dimension_numbers<[1], [1], [0], [0], [0, 0, 1, 0], [], []>} : vector<16x256xbf16>, vector<16x256xbf16>, vector<16x16xf32> -> vector<16x16xf32>
    %22 = arith.addf %18, %21 : vector<16x16xf32>
    %c0_19 = arith.constant 0 : index
    %c0_20 = arith.constant 0 : index
    %c0_21 = arith.constant 0 : index
    %23 = vector.load %arg9[%c0_19, %c0_20, %c0_21] : memref<1x16x16xf32, #tpu.memory_space<vmem>>, vector<1x16x16xf32>
    %24 = vector.shape_cast %23 : vector<1x16x16xf32> to vector<16x16xf32>
    %25 = vector.shape_cast %22 : vector<16x16xf32> to vector<1x16x16xf32>
    tpu.vector_store %arg9[%c0_19, %c0_20, %c0_21], %25 {strides = array<i32>} : memref<1x16x16xf32, #tpu.memory_space<vmem>>, vector<1x16x16xf32>,
    return
  }
  func.func @transform_0(%arg0: i32, %arg1: i32, %arg2: i32) -> (i32, i32, i32) {
    %c1_i32 = arith.constant 1 : i32
    %0 = arith.muli %arg1, %c1_i32 : i32
    %1 = arith.addi %0, %arg2 : i32
    %c0_i32 = arith.constant 0 : i32
    %c0_i32_0 = arith.constant 0 : i32
    return %arg0, %c0_i32, %1 : i32, i32, i32
  }
  func.func @transform_1(%arg0: i32, %arg1: i32, %arg2: i32) -> (i32, i32, i32) {
    %c1_i32 = arith.constant 1 : i32
    %0 = arith.muli %arg1, %c1_i32 : i32
    %1 = arith.addi %0, %arg2 : i32
    %c0_i32 = arith.constant 0 : i32
    %c0_i32_0 = arith.constant 0 : i32
    return %arg0, %c0_i32, %1 : i32, i32, i32
  }
  func.func @transform_2(%arg0: i32, %arg1: i32, %arg2: i32) -> (i32, i32) {
    %c0_i32 = arith.constant 0 : i32
    %c0_i32_0 = arith.constant 0 : i32
    %c0_i32_1 = arith.constant 0 : i32
    return %c0_i32, %c0_i32_0 : i32, i32
  }
  func.func @transform_3(%arg0: i32, %arg1: i32, %arg2: i32) -> (i32, i32) {
    %c0_i32 = arith.constant 0 : i32
    %c0_i32_0 = arith.constant 0 : i32
    %c0_i32_1 = arith.constant 0 : i32
    return %c0_i32, %c0_i32_0 : i32, i32
  }
  func.func @transform_4(%arg0: i32, %arg1: i32, %arg2: i32) -> (i32, i32) {
    %c0_i32 = arith.constant 0 : i32
    %c0_i32_0 = arith.constant 0 : i32
    %c0_i32_1 = arith.constant 0 : i32
    return %c0_i32, %c0_i32_0 : i32, i32
  }
  func.func @transform_5(%arg0: i32, %arg1: i32, %arg2: i32) -> (i32, i32) {
    %c0_i32 = arith.constant 0 : i32
    %c0_i32_0 = arith.constant 0 : i32
    %c0_i32_1 = arith.constant 0 : i32
    return %c0_i32, %c0_i32_0 : i32, i32
  }
  func.func @transform_6(%arg0: i32, %arg1: i32, %arg2: i32) -> (i32, i32, i32) {
    %c1_i32 = arith.constant 1 : i32
    %0 = arith.muli %arg0, %c1_i32 : i32
    %1 = arith.addi %0, %arg1 : i32
    %c0_i32 = arith.constant 0 : i32
    %c0_i32_0 = arith.constant 0 : i32
    %c0_i32_1 = arith.constant 0 : i32
    return %1, %c0_i32, %c0_i32_0 : i32, i32, i32
  }
}

</mosaic_0001>

<llo_original>
// kernel: tpu_custom_call.1
$region0: #{tpu_custom_call.1}
  #allocation0 [shape = 'u32[]', space=smem, size = 0x4, offset = 0x4, fixed_abs, tag = 'smem constant byte address 0x4 - core index']
  #allocation1 [shape = 'u32[144,128]{1,0:T(1,128)}', space=vmem, size = 0x12000, scoped, tag = 'internal scratch']
  %s0 = inlined_call_operand.vmem [shape: bf16[2,16,256], index: 0, kind: input, shape index: {}]
  %s1 = inlined_call_operand.hbm [shape: bf16[2,16,256], index: 1, kind: input, shape index: {}]
  %s2 = inlined_call_operand.hbm [shape: bf16[16,16], index: 2, kind: input, shape index: {}]
  %s3 = inlined_call_operand.vmem [shape: f32[16,1], index: 3, kind: input, shape index: {}]
  %s4 = inlined_call_operand.vmem [shape: bf16[16,16], index: 4, kind: input, shape index: {}]
  %s5 = inlined_call_operand.vmem [shape: f32[16,1], index: 5, kind: input, shape index: {}]
  %s6 = inlined_call_operand.hbm [shape: f32[2,16,16], index: 6, kind: output, shape index: {}]
  %s7 = sld [smem:[#allocation0]]
  $region69: #{tpu_custom_call.1} parent=0
    _
  %s9 = ssub.s32 1, %s7
  %s10 = scalar_select 0, %s9, %s7
  $region1: #{tpu_custom_call.1} parent=0
    #allocation2 [shape = 'u8[16384]{0}', space=vmem, size = 0x4000, scoped, tag = 'input window, operand 1']
    #allocation3 [shape = 's32[2]{0}', space=sflag, size = 0x8, scoped, tag = 'scoped memory for tpu_custom_call.1']
    #allocation4 [shape = 's32[2]{0}', space=sflag, size = 0x8, scoped, tag = 'scoped memory for tpu_custom_call.1']
    #allocation5 [shape = 'u8[4096]{0}', space=vmem, size = 0x1000, scoped, tag = 'input window, operand 2, single buffered']
    #allocation6 [shape = 's32[1]{0}', space=sflag, size = 0x4, scoped, tag = 'scoped memory for tpu_custom_call.1']
    #allocation7 [shape = 'u8[16384]{0}', space=vmem, size = 0x4000, scoped, tag = 'output window, operand 0']
    %11 = vsyncpa [#allocation3], 0
    %s12 = scalar_lea.sflag [#allocation3], 1
    %13 = vsyncpa %s12, 0
    %14 = vsyncpa [#allocation6], 0
    %15 = vsyncpa [#allocation4], 0
    %s16 = scalar_lea.sflag [#allocation4], 1
    %17 = vsyncpa %s16, 0
    loop: start=0, step=1, limit=4
    $region2: #{tpu_custom_call.1} parent=1 // loop_pre_header
      _
    $region3: #{tpu_custom_call.1} parent=1 // loop_header
      %s19 = sphi 0, %s23
      %p20 = scmp.ge.s32.totalorder %s19, 4
      %s26 = sphi 0, %s45
      %s27 = sphi 0, %s41
      %s28 = sphi 0, %s37
      %s29 = sphi 0, %s26
      %s30 = sphi 0, %s27
      %s31 = sphi 0, %s28
      %s32 = sphi 0, %s29
      %s33 = sphi 0, %s30
      %s34 = sphi 0, %s31
      %s52 = sphi 0, %s54
      %s55 = sphi 0, %s52
      %s56 = sphi 0, %s55
      %s72 = sphi 0, %s56
      %s82 = sphi 0, %s84
      %s85 = sphi 0, %s82
      %s86 = sphi 0, %s85
      %s102 = sphi 0, %s86
      %s106 = sphi 0, %s106
      %s108 = sphi 0, %s106
      %s109 = sphi 0, %s108
      %s123 = sphi 0, %s109
      %s127 = sphi 0, %s127
      %s129 = sphi 0, %s127
      %s130 = sphi 0, %s129
      %s144 = sphi 0, %s130
      %s148 = sphi 0, %s148
      %s150 = sphi 0, %s148
      %s151 = sphi 0, %s150
      %s165 = sphi 0, %s151
      %s169 = sphi 0, %s169
      %s171 = sphi 0, %s169
      %s172 = sphi 0, %s171
      %s186 = sphi 0, %s172
      %s194 = sphi 0, %s196
      %s197 = sphi 0, %s194
      %s198 = sphi 0, %s197
      %s214 = sphi 0, %s198
    $region4: #{tpu_custom_call.1} parent=1 // loop_header_branch
      %22 = sbr.rel (%p20) target = $region8
    $region5: #{tpu_custom_call.1} parent=1 // loop_body
      %s24 = ssub.s32 %s19, 1
      %s25 = ssub.s32 %s19, 2
      %s35 = sadd.s32 1, %s28
      %p36 = scmp.ge.s32.totalorder %s35, 1
      %s37 = scalar_select %p36, 0, %s35
      %s38 = sadd.s32 1, %s27
      %s39 = scalar_select %p36, %s38, %s27
      %p40 = scmp.ge.s32.totalorder %s39, 1
      %s41 = scalar_select %p40, 0, %s39
      %s42 = sadd.s32 1, %s26
      %s43 = scalar_select %p40, %s42, %s26
      %p44 = scmp.ge.s32.totalorder %s43, 2
      %s45 = scalar_select %p44, 0, %s43
      %s46 = sadd.s32 %s27, %s28
      %s47 = sadd.s32 %s41, %s37
      %s48 = ssub.s32 %s26, %s45
      %s49 = ssub.s32 %s46, %s47
      %s50 = sor.u32 %s48, %s49
      %p51 = scmp.eq.s32.totalorder %s50, 0
      %s53 = sadd.s32 %s52, 1
      %s54 = scalar_select %p51, %s52, %s53
      %p57 = pneg %p51
      %p58 = scmp.eq.s32.totalorder %s19, 1
      %p59 = por %p57, %p58
      %p60 = scmp.ne.s32.totalorder %s52, %s55
      %p61 = scmp.eq.s32.totalorder %s19, 0
      %p62 = por %p60, %p61
      %p63 = scmp.ne.s32.totalorder %s52, %s55
      %p64 = scmp.eq.s32.totalorder %s24, 1
      %p65 = por %p63, %p64
      %p66 = scmp.ne.s32.totalorder %s55, %s56
      %p67 = scmp.eq.s32.totalorder %s24, 0
      %p68 = por %p66, %p67
      %p69 = scmp.ne.s32.totalorder %s55, %s56
      %p70 = scmp.eq.s32.totalorder %s25, 1
      %p71 = por %p69, %p70
      %p73 = scmp.ne.s32.totalorder %s56, %s72
      %p74 = scmp.eq.s32.totalorder %s25, 0
      %p75 = por %p73, %p74
      %s76 = sadd.s32 %s27, %s28
      %s77 = sadd.s32 %s41, %s37
      %s78 = ssub.s32 %s26, %s45
      %s79 = ssub.s32 %s76, %s77
      %s80 = sor.u32 %s78, %s79
      %p81 = scmp.eq.s32.totalorder %s80, 0
      %s83 = sadd.s32 %s82, 1
      %s84 = scalar_select %p81, %s82, %s83
      %p87 = pneg %p81
      %p88 = scmp.eq.s32.totalorder %s19, 1
      %p89 = por %p87, %p88
      %p90 = scmp.ne.s32.totalorder %s82, %s85
      %p91 = scmp.eq.s32.totalorder %s19, 0
      %p92 = por %p90, %p91
      %p93 = scmp.ne.s32.totalorder %s82, %s85
      %p94 = scmp.eq.s32.totalorder %s24, 1
      %p95 = por %p93, %p94
      %p96 = scmp.ne.s32.totalorder %s85, %s86
      %p97 = scmp.eq.s32.totalorder %s24, 0
      %p98 = por %p96, %p97
      %p99 = scmp.ne.s32.totalorder %s85, %s86
      %p100 = scmp.eq.s32.totalorder %s25, 1
      %p101 = por %p99, %p100
      %p103 = scmp.ne.s32.totalorder %s86, %s102
      %p104 = scmp.eq.s32.totalorder %s25, 0
      %p105 = por %p103, %p104
      %s107 = sadd.s32 %s106, 1
      %p110 = scmp.eq.s32.totalorder %s19, 1
      %p111 = scmp.ne.s32.totalorder %s106, %s108
      %p112 = scmp.eq.s32.totalorder %s19, 0
      %p113 = por %p111, %p112
      %p114 = scmp.ne.s32.totalorder %s106, %s108
      %p115 = scmp.eq.s32.totalorder %s24, 1
      %p116 = por %p114, %p115
      %p117 = scmp.ne.s32.totalorder %s108, %s109
      %p118 = scmp.eq.s32.totalorder %s24, 0
      %p119 = por %p117, %p118
      %p120 = scmp.ne.s32.totalorder %s108, %s109
      %p121 = scmp.eq.s32.totalorder %s25, 1
      %p122 = por %p120, %p121
      %p124 = scmp.ne.s32.totalorder %s109, %s123
      %p125 = scmp.eq.s32.totalorder %s25, 0
      %p126 = por %p124, %p125
      %s128 = sadd.s32 %s127, 1
      %p131 = scmp.eq.s32.totalorder %s19, 1
      %p132 = scmp.ne.s32.totalorder %s127, %s129
      %p133 = scmp.eq.s32.totalorder %s19, 0
      %p134 = por %p132, %p133
      %p135 = scmp.ne.s32.totalorder %s127, %s129
      %p136 = scmp.eq.s32.totalorder %s24, 1
      %p137 = por %p135, %p136
      %p138 = scmp.ne.s32.totalorder %s129, %s130
      %p139 = scmp.eq.s32.totalorder %s24, 0
      %p140 = por %p138, %p139
      %p141 = scmp.ne.s32.totalorder %s129, %s130
      %p142 = scmp.eq.s32.totalorder %s25, 1
      %p143 = por %p141, %p142
      %p145 = scmp.ne.s32.totalorder %s130, %s144
      %p146 = scmp.eq.s32.totalorder %s25, 0
      %p147 = por %p145, %p146
      %s149 = sadd.s32 %s148, 1
      %p152 = scmp.eq.s32.totalorder %s19, 1
      %p153 = scmp.ne.s32.totalorder %s148, %s150
      %p154 = scmp.eq.s32.totalorder %s19, 0
      %p155 = por %p153, %p154
      %p156 = scmp.ne.s32.totalorder %s148, %s150
      %p157 = scmp.eq.s32.totalorder %s24, 1
      %p158 = por %p156, %p157
      %p159 = scmp.ne.s32.totalorder %s150, %s151
      %p160 = scmp.eq.s32.totalorder %s24, 0
      %p161 = por %p159, %p160
      %p162 = scmp.ne.s32.totalorder %s150, %s151
      %p163 = scmp.eq.s32.totalorder %s25, 1
      %p164 = por %p162, %p163
      %p166 = scmp.ne.s32.totalorder %s151, %s165
      %p167 = scmp.eq.s32.totalorder %s25, 0
      %p168 = por %p166, %p167
      %s170 = sadd.s32 %s169, 1
      %p173 = scmp.eq.s32.totalorder %s19, 1
      %p174 = scmp.ne.s32.totalorder %s169, %s171
      %p175 = scmp.eq.s32.totalorder %s19, 0
      %p176 = por %p174, %p175
      %p177 = scmp.ne.s32.totalorder %s169, %s171
      %p178 = scmp.eq.s32.totalorder %s24, 1
      %p179 = por %p177, %p178
      %p180 = scmp.ne.s32.totalorder %s171, %s172
      %p181 = scmp.eq.s32.totalorder %s24, 0
      %p182 = por %p180, %p181
      %p183 = scmp.ne.s32.totalorder %s171, %s172
      %p184 = scmp.eq.s32.totalorder %s25, 1
      %p185 = por %p183, %p184
      %p187 = scmp.ne.s32.totalorder %s172, %s186
      %p188 = scmp.eq.s32.totalorder %s25, 0
      %p189 = por %p187, %p188
      %s190 = sadd.s32 %s26, %s27
      %s191 = sadd.s32 %s45, %s41
      %s192 = ssub.s32 %s190, %s191
      %p193 = scmp.eq.s32.totalorder %s192, 0
      %s195 = sadd.s32 %s194, 1
      %s196 = scalar_select %p193, %s194, %s195
      %p199 = pneg %p193
      %p200 = scmp.eq.s32.totalorder %s19, 1
      %p201 = por %p199, %p200
      %p202 = scmp.ne.s32.totalorder %s194, %s197
      %p203 = scmp.eq.s32.totalorder %s19, 0
      %p204 = por %p202, %p203
      %p205 = scmp.ne.s32.totalorder %s194, %s197
      %p206 = scmp.eq.s32.totalorder %s24, 1
      %p207 = por %p205, %p206
      %p208 = scmp.ne.s32.totalorder %s197, %s198
      %p209 = scmp.eq.s32.totalorder %s24, 0
      %p210 = por %p208, %p209
      %p211 = scmp.ne.s32.totalorder %s197, %s198
      %p212 = scmp.eq.s32.totalorder %s25, 1
      %p213 = por %p211, %p212
      %p215 = scmp.ne.s32.totalorder %s198, %s214
      %p216 = scmp.eq.s32.totalorder %s25, 0
      %p217 = por %p215, %p216
      %p218 = scmp.le.s32.totalorder 1, %s19
      %p219 = scmp.lt.s32.totalorder %s19, 3
      %p220 = pnand %p218, %p219
      %p221 = pneg %p220
      // Predicated region
      $region9: #{tpu_custom_call.1} parent=5 // pred_check
        _
      $region10: #{tpu_custom_call.1} parent=5 // pred_check_branch
        %223 = sbr.rel (%p220) target = $region12
      $region11: #{tpu_custom_call.1} parent=5 // pred_region
        %s224 = ssub.s32 %s19, 1
        // Predicated region
        $region13: #{tpu_custom_call.1} parent=11 // pred_check
          %p225 = pneg %p119
        $region14: #{tpu_custom_call.1} parent=11 // pred_check_branch
          %227 = sbr.rel (%p225) target = $region16
        $region15: #{tpu_custom_call.1} parent=11 // pred_region
          %s229 = ssub.s32 128, 128
          %230 = vsyncadd [#allocation6], %s229
          %s231 = sshll.u32 [#allocation5], 4
          %s232 = int_to_ptr.vmem [resolvable:$true] %s231
          %237 = dma.hbm_to_vmem [thread:$0]  %s2, 128, %s232, [#allocation6], 64, 64, 4
        $region16: #{tpu_custom_call.1} parent=11 // pred_fallthru
          _
        // Predicated region
        $region17: #{tpu_custom_call.1} parent=11 // pred_check
          %p238 = pneg %p140
        $region18: #{tpu_custom_call.1} parent=11 // pred_check_branch
          %240 = sbr.rel (%p238) target = $region20
        $region19: #{tpu_custom_call.1} parent=11 // pred_region
          _
        $region20: #{tpu_custom_call.1} parent=11 // pred_fallthru
          _
        // Predicated region
        $region21: #{tpu_custom_call.1} parent=11 // pred_check
          %p241 = pneg %p161
        $region22: #{tpu_custom_call.1} parent=11 // pred_check_branch
          %243 = sbr.rel (%p241) target = $region24
        $region23: #{tpu_custom_call.1} parent=11 // pred_region
          _
        $region24: #{tpu_custom_call.1} parent=11 // pred_fallthru
          _
        // Predicated region
        $region25: #{tpu_custom_call.1} parent=11 // pred_check
          %p244 = pneg %p182
        $region26: #{tpu_custom_call.1} parent=11 // pred_check_branch
          %246 = sbr.rel (%p244) target = $region28
        $region27: #{tpu_custom_call.1} parent=11 // pred_region
          _
        $region28: #{tpu_custom_call.1} parent=11 // pred_fallthru
          _
      $region12: #{tpu_custom_call.1} parent=5 // pred_fallthru
        _
      %p247 = scmp.lt.s32.totalorder %s19, 2
      // Predicated region
      $region29: #{tpu_custom_call.1} parent=5 // pred_check
        %p248 = pneg %p247
      $region30: #{tpu_custom_call.1} parent=5 // pred_check_branch
        %250 = sbr.rel (%p248) target = $region32
      $region31: #{tpu_custom_call.1} parent=5 // pred_region
        // Predicated region
        $region33: #{tpu_custom_call.1} parent=31 // pred_check
          %p251 = pneg %p62
        $region34: #{tpu_custom_call.1} parent=31 // pred_check_branch
          %253 = sbr.rel (%p251) target = $region36
        $region35: #{tpu_custom_call.1} parent=31 // pred_region
          %s254 = sadd.s32 %s27, %s28
          %s255 = smul.u32 2, %s254
          %p256 = scmp.lt.s32.totalorder %s26, 1
          %s257 = scalar_select %p256, %s26, 1
          %p258 = scmp.lt.s32.totalorder %s255, 1
          %s259 = scalar_select %p258, %s255, 1
          %s260 = smul.addr %s257, 4
          %s261 = sadd.s32 %s259, %s260
          %s262 = smul.addr %s261, 4
          %s263 = scalar_lea.vmem %s0, %s262
          %s264 = sadd.s32 %s27, %s28
          %s265 = smul.u32 2, %s264
        $region36: #{tpu_custom_call.1} parent=31 // pred_fallthru
          _
        // Predicated region
        $region37: #{tpu_custom_call.1} parent=31 // pred_check
          %p266 = pneg %p92
        $region38: #{tpu_custom_call.1} parent=31 // pred_check_branch
          %268 = sbr.rel (%p266) target = $region40
        $region39: #{tpu_custom_call.1} parent=31 // pred_region
          %s269 = sand.u32 %s82, 1
          %s270 = scalar_lea.sflag [#allocation3], %s269
          %s271 = sand.u32 %s82, 1
          %s272 = smul.addr %s271, 16
          %s273 = scalar_lea.vmem [#allocation2], %s272
          %s274 = sadd.s32 %s27, %s28
          %s275 = smul.u32 2, %s274
          %s277 = ssub.s32 256, 256
          %278 = vsyncadd %s270, %s277
          %s279 = smul.addr %s26, 4
          %s280 = sadd.s32 %s275, %s279
          %s281 = smul.addr %s280, 64
          %s282 = scalar_lea.hbm %s1, %s281
          %s283 = sshll.u32 %s273, 4
          %s284 = int_to_ptr.vmem [resolvable:$true] %s283
          %289 = dma.hbm_to_vmem [thread:$0]  %s282, 256, %s284, %s270, 128, 128, 8
        $region40: #{tpu_custom_call.1} parent=31 // pred_fallthru
          _
      $region32: #{tpu_custom_call.1} parent=5 // pred_fallthru
        _
      %p290 = scmp.le.s32.totalorder 1, %s19
      %p291 = scmp.lt.s32.totalorder %s19, 3
      %p292 = pnand %p290, %p291
      %p293 = pneg %p292
      // Predicated region
      $region41: #{tpu_custom_call.1} parent=5 // pred_check
        _
      $region42: #{tpu_custom_call.1} parent=5 // pred_check_branch
        %295 = sbr.rel (%p292) target = $region44
      $region43: #{tpu_custom_call.1} parent=5 // pred_region
        %s296 = ssub.s32 %s19, 1
        %s297 = sand.u32 %s85, 1
        %s298 = scalar_lea.sflag [#allocation3], %s297
        %s299 = sand.u32 %s85, 1
        %s300 = smul.addr %s299, 16
        %s301 = scalar_lea.vmem [#allocation2], %s300
        // Predicated region
        $region45: #{tpu_custom_call.1} parent=43 // pred_check
          %p302 = pneg %p98
        $region46: #{tpu_custom_call.1} parent=43 // pred_check_branch
          %304 = sbr.rel (%p302) target = $region48
        $region47: #{tpu_custom_call.1} parent=43 // pred_region
          %305 = dma.done %s298, 256
        $region48: #{tpu_custom_call.1} parent=43 // pred_fallthru
          _
        // Predicated region
        $region49: #{tpu_custom_call.1} parent=43 // pred_check
          %p306 = pneg %p119
        $region50: #{tpu_custom_call.1} parent=43 // pred_check_branch
          %308 = sbr.rel (%p306) target = $region52
        $region51: #{tpu_custom_call.1} parent=43 // pred_region
          %309 = dma.done [#allocation6], 128
        $region52: #{tpu_custom_call.1} parent=43 // pred_fallthru
          _
        %s310 = sadd.s32 %s30, %s31
        %s311 = smul.u32 2, %s310
        %p312 = scmp.lt.s32.totalorder %s29, 1
        %s313 = scalar_select %p312, %s29, 1
        %p314 = scmp.lt.s32.totalorder %s311, 1
        %s315 = scalar_select %p314, %s311, 1
        %s316 = smul.addr %s313, 4
        %s317 = sadd.s32 %s315, %s316
        %s318 = smul.addr %s317, 4
        %s319 = scalar_lea.vmem %s0, %s318
        %p320 = pneg %p68
        %p321 = pneg %p65
        %s322 = sand.u32 %s85, 1
        %s323 = scalar_lea.sflag [#allocation3], %s322
        %s324 = sand.u32 %s85, 1
        %s325 = smul.addr %s324, 16
        %s326 = scalar_lea.vmem [#allocation2], %s325
        %p327 = pneg %p98
        %p328 = pneg %p95
        %p329 = pneg %p119
        %p330 = pneg %p116
        %p331 = pneg %p140
        %p332 = pneg %p137
        %p333 = pneg %p161
        %p334 = pneg %p158
        %p335 = pneg %p182
        %p336 = pneg %p179
        %p337 = pneg %p210
        %p338 = pneg %p207
        %s339 = sand.u32 %s197, 1
        %s340 = scalar_lea.sflag [#allocation4], %s339
        %s341 = sand.u32 %s197, 1
        %s342 = smul.addr %s341, 16
        %s343 = scalar_lea.vmem [#allocation7], %s342
        %s344 = sadd.s32 %s30, %s31
        %s345 = smul.u32 2, %s344
        %p346 = scmp.lt.s32.totalorder %s29, 1
        %s347 = scalar_select %p346, %s29, 1
        %p348 = scmp.lt.s32.totalorder %s345, 1
        %s349 = scalar_select %p348, %s345, 1
        %s350 = smul.addr %s347, 4
        %s351 = sadd.s32 %s349, %s350
        %s352 = smul.addr %s351, 4
        %s353 = scalar_lea.vmem %s0, %s352
        %s354 = sadd.s32 %s30, %s31
        %s355 = smul.u32 2, %s354
        %s356 = sadd.s32 %s30, %s31
        %s357 = smul.u32 2, %s356
        %s358 = sadd.s32 %s29, %s30
        %p360 = scmp.eq.s32.totalorder %s31, 0
        // Predicated region
        $region53: #{tpu_custom_call.1} parent=43 // pred_check
          %p361 = pneg %p360
        $region54: #{tpu_custom_call.1} parent=43 // pred_check_branch
          %363 = sbr.rel (%p361) target = $region56
        $region55: #{tpu_custom_call.1} parent=43 // pred_region
          %vm364 = vcmask 130048
          %365 = vst.msk [vmem:[%s343] sm:$0xff] %vm364, 0.0
          %366 = vst.msk [vmem:[%s343 + $0x8] sm:$0xff] %vm364, 0.0
        $region56: #{tpu_custom_call.1} parent=43 // pred_fallthru
          _
        %v367 = vld [vmem:[#allocation5] sm:$0xf]
        %v368 = vld [vmem:[#allocation5 + $0x4] sm:$0xf]
        %v369 = vld [vmem:[%s353] sm:$0xff]
        %v370 = vld [vmem:[%s353 + $0x8] sm:$0xff]
        %v371 = vld [vmem:[%s3] sm:$0xff]
        %v372 = vld [vmem:[%s3 + $0x8] sm:$0xff]
        %374 = vset.pattern.permute.xlu0 0
        %375 = vperm.xlu0 %374, %v371
        %v376 = vpop.permute.xlu0 %375
        %379 = vset.pattern.permute.xlu0 0
        %380 = vperm.xlu0 %379, %v372
        %v381 = vpop.permute.xlu0 %380
        %v385 = vunpack.c.l.b16 %v367
        %v386 = vunpack.c.l.b16 %v368
        %v387 = vpack.c.b16 %v386, %v385
        %v390 = vunpack.c.l.b16 %v369
        %v391 = vunpack.c.h.b16 %v369
        %v392 = vunpack.c.l.b16 %v370
        %v393 = vunpack.c.h.b16 %v370
        %v394 = vpack.c.b16 %v392, %v390
        %v395 = vpack.c.b16 %v393, %v391
        %vm398 = vcmask 130048
        %v400 = vsel %vm398, %v387, 0
        %402 = vmatprep.subr.bf16.mxu0 0
        %403 = vmatpush1.bf16.msra.mxu0 0
        %404 = vmatprep.subr.bf16.mxu0 0
        %405 = vmatpush1.bf16.msra.mxu0 0
        %406 = vmatprep.subr.bf16.mxu0 0
        %407 = vmatpush1.bf16.msra.mxu0 0
        %408 = vmatprep.subr.bf16.mxu0 0
        %409 = vmatpush1.bf16.msra.mxu0 0
        %410 = vmatprep.subr.bf16.mxu0 0
        %411 = vmatpush1.bf16.msra.mxu0 0
        %412 = vmatprep.subr.bf16.mxu0 0
        %413 = vmatpush1.bf16.msra.mxu0 0
        %414 = vmatprep.subr.bf16.mxu0 0
        %415 = vmatpush1.bf16.msra.mxu0 0
        %416 = vmatprep.subr.bf16.mxu0 %v395
        %417 = vmatpush1.bf16.msra.mxu0 %v394
        %418 = vmatprep.subr.bf16.mxu0 0
        %419 = vmatpush2.bf16.msra.mxu0 0
        %420 = vmatprep.subr.bf16.mxu0 0
        %421 = vmatpush2.bf16.msra.mxu0 0
        %422 = vmatprep.subr.bf16.mxu0 0
        %423 = vmatpush2.bf16.msra.mxu0 0
        %424 = vmatprep.subr.bf16.mxu0 0
        %425 = vmatpush2.bf16.msra.mxu0 0
        %426 = vmatprep.subr.bf16.mxu0 0
        %427 = vmatpush2.bf16.msra.mxu0 0
        %428 = vmatprep.subr.bf16.mxu0 0
        %429 = vmatpush2.bf16.msra.mxu0 0
        %430 = vmatprep.subr.bf16.mxu0 0
        %431 = vmatpush2.bf16.msra.mxu0 0
        %432 = vmatprep.subr.bf16.mxu0 0
        %433 = vmatpush2.bf16.msra.mxu0 0
        %434 = vmatprep.mubr.bf16.mxu0 0
        %435 = vmatmul.mubr.bf16.gmra.mxu0 %v400
        %v436 = vpop.f32.mrf.mxu0
        %v437 = vadd.f32 %v376, %v436
        %v438 = vpop.f32.mrf.mxu0
        %v439 = vadd.f32 %v376, %v438
        %v440 = vpop.f32.mrf.mxu0
        %v441 = vadd.f32 %v381, %v440
        %v442 = vpop.f32.mrf.mxu0
        %v443 = vadd.f32 %v381, %v442
        %444 = vdwg.mxu0
        %v445 = vld [vmem:[%s4] sm:$0xf]
        %v446 = vld [vmem:[%s4 + $0x4] sm:$0xf]
        %v447 = vld [vmem:[%s301] sm:$0xff]
        %v448 = vld [vmem:[%s301 + $0x8] sm:$0xff]
        %v449 = vld [vmem:[%s5] sm:$0xff]
        %v450 = vld [vmem:[%s5 + $0x8] sm:$0xff]
        %452 = vset.pattern.permute.xlu0 0
        %453 = vperm.xlu0 %452, %v449
        %v454 = vpop.permute.xlu0 %453
        %457 = vset.pattern.permute.xlu0 0
        %458 = vperm.xlu0 %457, %v450
        %v459 = vpop.permute.xlu0 %458
        %v463 = vunpack.c.l.b16 %v445
        %v464 = vunpack.c.l.b16 %v446
        %v465 = vpack.c.b16 %v464, %v463
        %v468 = vunpack.c.l.b16 %v447
        %v469 = vunpack.c.h.b16 %v447
        %v470 = vunpack.c.l.b16 %v448
        %v471 = vunpack.c.h.b16 %v448
        %v472 = vpack.c.b16 %v470, %v468
        %v473 = vpack.c.b16 %v471, %v469
        %v477 = vsel %vm398, %v465, 0
        %479 = vmatprep.subr.bf16.mxu0 0
        %480 = vmatpush1.bf16.msra.mxu0 0
        %481 = vmatprep.subr.bf16.mxu0 0
        %482 = vmatpush1.bf16.msra.mxu0 0
        %483 = vmatprep.subr.bf16.mxu0 0
        %484 = vmatpush1.bf16.msra.mxu0 0
        %485 = vmatprep.subr.bf16.mxu0 0
        %486 = vmatpush1.bf16.msra.mxu0 0
        %487 = vmatprep.subr.bf16.mxu0 0
        %488 = vmatpush1.bf16.msra.mxu0 0
        %489 = vmatprep.subr.bf16.mxu0 0
        %490 = vmatpush1.bf16.msra.mxu0 0
        %491 = vmatprep.subr.bf16.mxu0 0
        %492 = vmatpush1.bf16.msra.mxu0 0
        %493 = vmatprep.subr.bf16.mxu0 %v473
        %494 = vmatpush1.bf16.msra.mxu0 %v472
        %495 = vmatprep.subr.bf16.mxu0 0
        %496 = vmatpush2.bf16.msra.mxu0 0
        %497 = vmatprep.subr.bf16.mxu0 0
        %498 = vmatpush2.bf16.msra.mxu0 0
        %499 = vmatprep.subr.bf16.mxu0 0
        %500 = vmatpush2.bf16.msra.mxu0 0
        %501 = vmatprep.subr.bf16.mxu0 0
        %502 = vmatpush2.bf16.msra.mxu0 0
        %503 = vmatprep.subr.bf16.mxu0 0
        %504 = vmatpush2.bf16.msra.mxu0 0
        %505 = vmatprep.subr.bf16.mxu0 0
        %506 = vmatpush2.bf16.msra.mxu0 0
        %507 = vmatprep.subr.bf16.mxu0 0
        %508 = vmatpush2.bf16.msra.mxu0 0
        %509 = vmatprep.subr.bf16.mxu0 0
        %510 = vmatpush2.bf16.msra.mxu0 0
        %511 = vmatprep.mubr.bf16.mxu0 0
        %512 = vmatmul.mubr.bf16.gmra.mxu0 %v477
        %v513 = vpop.f32.mrf.mxu0
        %v514 = vadd.f32 %v454, %v513
        %v515 = vpop.f32.mrf.mxu0
        %v516 = vadd.f32 %v454, %v515
        %v517 = vpop.f32.mrf.mxu0
        %v518 = vadd.f32 %v459, %v517
        %v519 = vpop.f32.mrf.mxu0
        %v520 = vadd.f32 %v459, %v519
        %521 = vdwg.mxu0
        %v522 = vld [vmem:[%s343] sm:$0xff]
        %v523 = vld [vmem:[%s343 + $0x8] sm:$0xff]
        %v524 = vpack.c.bf16 %v441, %v437
        %v525 = vpack.c.bf16 %v443, %v439
        %v526 = vpack.c.bf16 %v518, %v514
        %v527 = vpack.c.bf16 %v520, %v516
        %528 = vmatprep.subr.bf16.mxu0 0
        %529 = vmatpush1.bf16.xpose.msra.mxu0 0
        %530 = vmatprep.subr.bf16.mxu0 0
        %531 = vmatpush1.bf16.xpose.msra.mxu0 0
        %532 = vmatprep.subr.bf16.mxu0 0
        %533 = vmatpush1.bf16.xpose.msra.mxu0 0
        %534 = vmatprep.subr.bf16.mxu0 0
        %535 = vmatpush1.bf16.xpose.msra.mxu0 0
        %536 = vmatprep.subr.bf16.mxu0 0
        %537 = vmatpush1.bf16.xpose.msra.mxu0 0
        %538 = vmatprep.subr.bf16.mxu0 0
        %539 = vmatpush1.bf16.xpose.msra.mxu0 0
        %540 = vmatprep.subr.bf16.mxu0 0
        %541 = vmatpush1.bf16.xpose.msra.mxu0 0
        %542 = vmatprep.subr.bf16.mxu0 %v527
        %543 = vmatpush1.bf16.xpose.msra.mxu0 %v526
        %544 = vmatprep.subr.bf16.mxu0 0
        %545 = vmatpush2.bf16.xpose.msra.mxu0 0
        %546 = vmatprep.subr.bf16.mxu0 0
        %547 = vmatpush2.bf16.xpose.msra.mxu0 0
        %548 = vmatprep.subr.bf16.mxu0 0
        %549 = vmatpush2.bf16.xpose.msra.mxu0 0
        %550 = vmatprep.subr.bf16.mxu0 0
        %551 = vmatpush2.bf16.xpose.msra.mxu0 0
        %552 = vmatprep.subr.bf16.mxu0 0
        %553 = vmatpush2.bf16.xpose.msra.mxu0 0
        %554 = vmatprep.subr.bf16.mxu0 0
        %555 = vmatpush2.bf16.xpose.msra.mxu0 0
        %556 = vmatprep.subr.bf16.mxu0 0
        %557 = vmatpush2.bf16.xpose.msra.mxu0 0
        %558 = vmatprep.subr.bf16.mxu0 0
        %559 = vmatpush2.bf16.xpose.msra.mxu0 0
        %560 = vmatprep.mubr.bf16.mxu0 %v525
        %561 = vmatmul.mubr.bf16.gmra.mxu0 %v524
        %v562 = vpop.f32.mrf.mxu0
        %v563 = vadd.f32 0.0, %v562
        %v564 = vpop.f32.mrf.mxu0
        %v565 = vpop.f32.mrf.mxu0
        %v566 = vadd.f32 0.0, %v565
        %v567 = vpop.f32.mrf.mxu0
        %568 = vdwg.mxu0
        %v569 = vadd.f32 %v522, %v563
        %v570 = vadd.f32 %v523, %v566
        %571 = vst.msk [vmem:[%s343] sm:$0xff] %vm398, %v569
        %572 = vst.msk [vmem:[%s343 + $0x8] sm:$0xff] %vm398, %v570
        %s573 = sand.u32 %s197, 1
        %s574 = scalar_lea.sflag [#allocation4], %s573
        %s575 = sand.u32 %s197, 1
        %s576 = smul.addr %s575, 16
        %s577 = scalar_lea.vmem [#allocation7], %s576
        // Predicated region
        $region57: #{tpu_custom_call.1} parent=43 // pred_check
          %p578 = pneg %p207
        $region58: #{tpu_custom_call.1} parent=43 // pred_check_branch
          %580 = sbr.rel (%p578) target = $region60
        $region59: #{tpu_custom_call.1} parent=43 // pred_region
          %s581 = sadd.s32 %s29, %s30
          %s583 = ssub.s32 256, 256
          %584 = vsyncadd %s574, %s583
          %s585 = smul.addr %s581, 2
          %s586 = smul.addr %s585, 128
          %s587 = scalar_lea.hbm %s6, %s586
          %s588 = sshll.u32 %s577, 4
          %s589 = int_to_ptr.vmem [resolvable:$true] %s588
          %594 = dma.vmem_to_hbm [thread:$0]  %s589, 256, %s587, %s574, 128, 128, 8
        $region60: #{tpu_custom_call.1} parent=43 // pred_fallthru
          _
      $region44: #{tpu_custom_call.1} parent=5 // pred_fallthru
        _
      %p595 = scmp.le.s32.totalorder 2, %s19
      // Predicated region
      $region61: #{tpu_custom_call.1} parent=5 // pred_check
        %p596 = pneg %p595
      $region62: #{tpu_custom_call.1} parent=5 // pred_check_branch
        %598 = sbr.rel (%p596) target = $region64
      $region63: #{tpu_custom_call.1} parent=5 // pred_region
        %s599 = ssub.s32 %s19, 2
        // Predicated region
        $region65: #{tpu_custom_call.1} parent=63 // pred_check
          %p600 = pneg %p213
        $region66: #{tpu_custom_call.1} parent=63 // pred_check_branch
          %602 = sbr.rel (%p600) target = $region68
        $region67: #{tpu_custom_call.1} parent=63 // pred_region
          %s603 = sand.u32 %s198, 1
          %s604 = scalar_lea.sflag [#allocation4], %s603
          %s605 = sand.u32 %s198, 1
          %s606 = smul.addr %s605, 16
          %s607 = scalar_lea.vmem [#allocation7], %s606
          %608 = dma.done %s604, 256
        $region68: #{tpu_custom_call.1} parent=63 // pred_fallthru
          _
      $region64: #{tpu_custom_call.1} parent=5 // pred_fallthru
        _
    $region6: #{tpu_custom_call.1} parent=1 // loop_footer
      %s23 = sadd.s32 1, %s19
    $region7: #{tpu_custom_call.1} parent=1 // loop_footer_branch
      %18 = sbr.rel target = $region3
    $region8: #{tpu_custom_call.1} parent=1 // loop_exit
      _
    %609 = vsyncpa [#allocation3], 1
    %s610 = scalar_lea.sflag [#allocation3], 1
    %611 = vsyncpa %s610, 1
    %612 = vsyncpa [#allocation6], 1
    %613 = vsyncpa [#allocation4], 1
    %s614 = scalar_lea.sflag [#allocation4], 1
    %615 = vsyncpa %s614, 1

</llo_original>
